<compile_context>
chip_gen: v7x
topology: tpu7x:2x2x1
jax: 0.10.0
libtpu: 0.0.40
codegen_flags: <defaults>
</compile_context>

<pallas_src>
import functools

import jax
import jax.numpy as jnp
from jax import lax
from jax.experimental import pallas as pl
from jax.experimental.pallas import tpu as pltpu


def _round_up(x, m):
    return ((x + m - 1) // m) * m


def _gated_act_stats_kernel(p_ref, w_ref, b_ref, y_ref, stats_ref,
                            *, c_out, m_real, tm, neg_slope):
    """Pass 1: fused (gating|feature) matmul + activations + gating product + BN partials.

    p_ref:     (K, TM)    bf16 im2col patches (transposed: M on the lane axis)
    w_ref:     (2C, K)    bf16 fused conv weights (rows [0,C) gating, [C,2C) feature)
    b_ref:     (2C, 1)    f32  fused biases
    y_ref:     (C, TM)    f32  gated activation output tile
    stats_ref: (1, C, 2)  f32  per-tile (sum, sum_sq) over valid columns
    """
    acts = jnp.dot(w_ref[...], p_ref[...],
                   preferred_element_type=jnp.float32)            # (2C, TM), f32 accumulate
    acts = acts + b_ref[...]

    gating = acts[:c_out, :]
    feature = acts[c_out:, :]

    feat_act = jnp.where(feature >= 0, feature, neg_slope * feature)   # LeakyReLU(0.2)
    gate_act = pl.reciprocal(1.0 + jnp.exp(-gating), approx=True)      # sigmoid on the EUP
    y = feat_act * gate_act                                            # (C, TM)
    y_ref[...] = y

    # BatchNorm partial statistics; mask out padded columns (M padded up to a multiple of TM).
    col = pl.program_id(0) * tm + lax.broadcasted_iota(jnp.int32, (1, tm), 1)
    valid = (col < m_real).astype(jnp.float32)                         # (1, TM)
    ym = y * valid
    s1 = jnp.sum(ym, axis=1, keepdims=True)                            # (C, 1)
    s2 = jnp.sum(ym * ym, axis=1, keepdims=True)                       # (C, 1)
    stats_ref[...] = jnp.concatenate([s1, s2], axis=1).reshape(1, c_out, 2)


def _bn_apply_kernel(y_ref, scale_ref, shift_ref, o_ref):
    """Pass 2: lane-dense per-channel affine: out = y * scale + shift."""
    o_ref[...] = y_ref[...] * scale_ref[...] + shift_ref[...]


def gated_conv2d(x_nchw, w_gating, b_gating, w_feature, b_feature, gamma, beta,
                 *, stride=1, padding=1, neg_slope=0.2, eps=1e-5, tm=1024):
    """Forward pass of GatedConv2d + BatchNorm2d (training-mode batch statistics)."""
    n, c_in, h, w = x_nchw.shape
    c_out, _, kh, kw = w_gating.shape

    # ---- plain-JAX glue: layout change, zero pad, im2col in transposed (K, M) layout ----
    # TODO(synk): im2col is still materialized host-side (kh*kw x HBM read amplification);
    # forming patches in-kernel from the padded NHWC tensor via shifted index_maps would cut
    # activation HBM traffic ~9x for 3x3 convs.
    x = jnp.transpose(x_nchw, (0, 2, 3, 1))                       # NHWC
    x = jnp.pad(x, ((0, 0), (padding, padding), (padding, padding), (0, 0)))
    h_out = (h + 2 * padding - kh) // stride + 1
    w_out = (w + 2 * padding - kw) // stride + 1
    m = n * h_out * w_out
    k_dim = kh * kw * c_in

    slabs = []
    for ki in range(kh):
        for kj in range(kw):
            slabs.append(x[:, ki:ki + stride * h_out:stride,
                           kj:kj + stride * w_out:stride, :])
    p = jnp.stack(slabs, axis=0)                                  # (kh*kw, N, Ho, Wo, C_in)
    patches_t = jnp.transpose(p, (0, 4, 1, 2, 3)).reshape(k_dim, m)   # (K, M)

    # Tile size along the lane (M) axis: multiple of 128, no larger than padded M.
    tm = max(128, min(_round_up(tm, 128), _round_up(m, 128)))
    m_pad = _round_up(m, tm)
    g = m_pad // tm
    if m_pad != m:
        patches_t = jnp.pad(patches_t, ((0, 0), (0, m_pad - m)))

    # Weights (C_out, C_in, kh, kw) -> (C_out, K) with K ordered (ki*kw+kj)*C_in + c,
    # fused along output channels; bf16 into the MXU (f32 accumulation in-kernel).
    def reshape_w(wt):
        return jnp.transpose(wt, (0, 2, 3, 1)).reshape(c_out, k_dim)

    w_cat = jnp.concatenate([reshape_w(w_gating), reshape_w(w_feature)],
                            axis=0).astype(jnp.bfloat16)          # (2C, K)
    b_cat = jnp.concatenate([b_gating, b_feature]).reshape(2 * c_out, 1).astype(jnp.float32)
    patches_bf16 = patches_t.astype(jnp.bfloat16)

    # VMEM budget: ~2x double-buffered tiles + resident weights, clamped to v7x's 64 MiB
    # physical VMEM (v5e/v6e have 128 MiB, so this limit is always safe there too).
    tile_bytes = (k_dim * tm * 2            # patches tile (bf16)
                  + c_out * tm * 4          # y tile (f32)
                  + 2 * c_out * k_dim * 2   # fused weights (bf16, resident)
                  + 2 * c_out * 4           # biases
                  + c_out * 2 * 4)          # stats tile
    vmem_limit = int(min(max(4 * tile_bytes, 32 * 1024 * 1024), 64 * 1024 * 1024))

    compiler_params = pltpu.CompilerParams(
        dimension_semantics=("parallel",), vmem_limit_bytes=vmem_limit)

    # ---- pass 1: fused conv matmul + activations + gating + BN partial sums ----
    y_full, stats = pl.pallas_call(
        functools.partial(_gated_act_stats_kernel, c_out=c_out, m_real=m, tm=tm,
                          neg_slope=neg_slope),
        out_shape=(jax.ShapeDtypeStruct((c_out, m_pad), jnp.float32),
                   jax.ShapeDtypeStruct((g, c_out, 2), jnp.float32)),
        grid_spec=pltpu.PrefetchScalarGridSpec(
            num_scalar_prefetch=0, grid=(g,),
            in_specs=[pl.BlockSpec((k_dim, tm), lambda i: (0, i)),
                      pl.BlockSpec((2 * c_out, k_dim), lambda i: (0, 0)),
                      pl.BlockSpec((2 * c_out, 1), lambda i: (0, 0))],
            out_specs=(pl.BlockSpec((c_out, tm), lambda i: (0, i)),
                       pl.BlockSpec((1, c_out, 2), lambda i: (i, 0, 0)))),
        compiler_params=compiler_params,
        cost_estimate=pl.CostEstimate(
            flops=2 * m_pad * k_dim * 2 * c_out,
            transcendentals=2 * m_pad * c_out,
            bytes_accessed=(patches_bf16.size * 2 + w_cat.size * 2
                            + c_out * m_pad * 4 + g * c_out * 2 * 4)),
    )(patches_bf16, w_cat, b_cat)

    # ---- tiny cross-tile reduction + BN scale/shift (global training-mode batch stats) ----
    # TODO(synk): running_mean/running_var momentum updates (module state) are not modeled.
    gamma_f = gamma.astype(jnp.float32)
    beta_f = beta.astype(jnp.float32)
    ssum = jnp.sum(stats[:, :, 0], axis=0)                        # (C,)
    ssq = jnp.sum(stats[:, :, 1], axis=0)                         # (C,)
    mean = ssum / m
    var = ssq / m - mean * mean                                   # biased variance (PyTorch BN)
    inv_std = lax.rsqrt(var + eps)
    scale = (gamma_f * inv_std).reshape(c_out, 1)
    shift = (beta_f - mean * gamma_f * inv_std).reshape(c_out, 1)

    # ---- pass 2: apply BN, lane-dense over M ----
    out_t = pl.pallas_call(
        _bn_apply_kernel,
        out_shape=jax.ShapeDtypeStruct((c_out, m_pad), jnp.float32),
        grid_spec=pltpu.PrefetchScalarGridSpec(
            num_scalar_prefetch=0, grid=(g,),
            in_specs=[pl.BlockSpec((c_out, tm), lambda i: (0, i)),
                      pl.BlockSpec((c_out, 1), lambda i: (0, 0)),
                      pl.BlockSpec((c_out, 1), lambda i: (0, 0))],
            out_specs=pl.BlockSpec((c_out, tm), lambda i: (0, i))),
        compiler_params=compiler_params,
    )(y_full, scale, shift)

    # (C, M) -> (C, N, Ho, Wo) -> NCHW to match PyTorch
    out = out_t[:, :m].reshape(c_out, n, h_out, w_out)
    return jnp.transpose(out, (1, 0, 2, 3))


def _reference(x_nchw, w_gating, b_gating, w_feature, b_feature, gamma, beta,
               *, stride=1, padding=1, neg_slope=0.2, eps=1e-5):
    """Pure-JAX reference (lax.conv, f32) for correctness checking."""
    dn = lax.conv_dimension_numbers(x_nchw.shape, w_gating.shape, ('NCHW', 'OIHW', 'NCHW'))
    conv = lambda x, wt: lax.conv_general_dilated(
        x, wt, (stride, stride), [(padding, padding), (padding, padding)],
        dimension_numbers=dn)
    g = conv(x_nchw, w_gating) + b_gating[None, :, None, None]
    f = conv(x_nchw, w_feature) + b_feature[None, :, None, None]
    y = jnp.where(f >= 0, f, neg_slope * f) * jax.nn.sigmoid(g)
    mean = jnp.mean(y, axis=(0, 2, 3), keepdims=True)
    var = jnp.mean((y - mean) ** 2, axis=(0, 2, 3), keepdims=True)
    return (y - mean) * lax.rsqrt(var + eps) * gamma[None, :, None, None] + beta[None, :, None, None]


if __name__ == "__main__":
    # Small shapes consistent with the module: N=2, C_in=4, H=W=16, C_out=8, 3x3 conv, pad=1.
    N, C_IN, H, W = 2, 4, 16, 16
    C_OUT, KH, KW = 8, 3, 3

    key = jax.random.PRNGKey(0)
    k1, k2, k3, k4, k5 = jax.random.split(key, 5)

    x = jax.random.normal(k1, (N, C_IN, H, W), dtype=jnp.float32)
    w_gating = 0.1 * jax.random.normal(k2, (C_OUT, C_IN, KH, KW), dtype=jnp.float32)
    w_feature = 0.1 * jax.random.normal(k3, (C_OUT, C_IN, KH, KW), dtype=jnp.float32)
    b_gating = 0.05 * jax.random.normal(k4, (C_OUT,), dtype=jnp.float32)
    b_feature = 0.05 * jax.random.normal(k5, (C_OUT,), dtype=jnp.float32)
    gamma = jnp.ones((C_OUT,), dtype=jnp.float32)   # BatchNorm2d default weight init
    beta = jnp.zeros((C_OUT,), dtype=jnp.float32)   # BatchNorm2d default bias init

    # tm=128 at these toy shapes to exercise the multi-tile grid path (M=512 -> 4 tiles)
    # and the cross-tile BatchNorm statistic aggregation.
    out = gated_conv2d(x, w_gating, b_gating, w_feature, b_feature, gamma, beta,
                       stride=1, padding=1, tm=128)
    out = jax.block_until_ready(out)

    ref = _reference(x, w_gating, b_gating, w_feature, b_feature, gamma, beta,
                     stride=1, padding=1)
    assert out.shape == (N, C_OUT, H, W)
    # bf16 MXU inputs + approx EUP reciprocal vs f32 reference, amplified by the BN
    # normalization (1/std ~ 5x here) -> compare at a bf16-appropriate tolerance.
    assert jnp.allclose(out, ref, rtol=5e-2, atol=5e-2), float(jnp.max(jnp.abs(out - ref)))

    print("KERNEL_OK")
</pallas_src>

<mosaic_0001>
module attributes {stable_mosaic.version = 11 : i64} {
  func.func @_gated_act_stats_kernel(%arg0: i32, %arg1: memref<36x128xbf16, #tpu.memory_space<vmem>>, %arg2: memref<16x36xbf16, #tpu.memory_space<vmem>>, %arg3: memref<16x1xf32, #tpu.memory_space<vmem>>, %arg4: memref<8x128xf32, #tpu.memory_space<vmem>>, %arg5: memref<1x8x2xf32, #tpu.memory_space<vmem>>) attributes {dimension_semantics = [#tpu.dimension_semantics<parallel>], iteration_bounds = array<i64: 4>, scalar_prefetch = 0 : i64, scratch_operands = 0 : i64, tpu.core_type = #tpu.core_type<tc>, window_params = [{transform_indices = @transform_0, window_bounds = array<i64: 36, 128>}, {pipeline_mode = #tpu.pipeline_mode<synchronous>, transform_indices = @transform_1, window_bounds = array<i64: 16, 36>}, {pipeline_mode = #tpu.pipeline_mode<synchronous>, transform_indices = @transform_2, window_bounds = array<i64: 16, 1>}, {transform_indices = @transform_3, window_bounds = array<i64: 8, 128>}, {transform_indices = @transform_4, window_bounds = array<i64: 1, 8, 2>}]} {
    %c0 = arith.constant 0 : index
    %c0_0 = arith.constant 0 : index
    %0 = vector.load %arg2[%c0, %c0_0] : memref<16x36xbf16, #tpu.memory_space<vmem>>, vector<16x36xbf16>
    %c0_1 = arith.constant 0 : index
    %c0_2 = arith.constant 0 : index
    %1 = vector.load %arg1[%c0_1, %c0_2] : memref<36x128xbf16, #tpu.memory_space<vmem>>, vector<36x128xbf16>
    %cst = arith.constant dense<0.000000e+00> : vector<16x128xf32>
    %2 = tpu.matmul %0, %1, %cst {dimension_numbers = #tpu.dot_dimension_numbers<[1], [0], [0], [1], [0, 0, 1, 1], [], []>} : vector<16x36xbf16>, vector<36x128xbf16>, vector<16x128xf32> -> vector<16x128xf32>
    %c0_3 = arith.constant 0 : index
    %c0_4 = arith.constant 0 : index
    %3 = vector.load %arg3[%c0_3, %c0_4] : memref<16x1xf32, #tpu.memory_space<vmem>>, vector<16x1xf32>
    %4 = vector.broadcast %3 : vector<16x1xf32> to vector<16x128xf32>
    %5 = arith.addf %2, %4 : vector<16x128xf32>
    %6 = vector.extract_strided_slice %5 {offsets = [0, 0], sizes = [8, 128], strides = [1, 1]} : vector<16x128xf32> to vector<8x128xf32>
    %7 = vector.extract_strided_slice %5 {offsets = [8, 0], sizes = [8, 128], strides = [1, 1]} : vector<16x128xf32> to vector<8x128xf32>
    %cst_5 = arith.constant 0.000000e+00 : f32
    %8 = vector.broadcast %cst_5 : f32 to vector<8x128xf32>
    %9 = arith.cmpf oge, %7, %8 : vector<8x128xf32>
    %cst_6 = arith.constant 2.000000e-01 : f32
    %10 = vector.broadcast %cst_6 : f32 to vector<8x128xf32>
    %11 = arith.mulf %10, %7 : vector<8x128xf32>
    %12 = arith.select %9, %7, %11 : vector<8x128xi1>, vector<8x128xf32>
    %cst_7 = arith.constant 0.000000e+00 : f32
    %13 = vector.broadcast %cst_7 : f32 to vector<8x128xf32>
    %14 = arith.subf %13, %6 : vector<8x128xf32>
    %15 = math.exp %14 : vector<8x128xf32>
    %cst_8 = arith.constant 1.000000e+00 : f32
    %16 = vector.broadcast %cst_8 : f32 to vector<8x128xf32>
    %17 = arith.addf %16, %15 : vector<8x128xf32>
    %18 = tpu.reciprocal %17 {approx = true} : vector<8x128xf32> -> vector<8x128xf32>
    %19 = arith.mulf %12, %18 : vector<8x128xf32>
    %c0_9 = arith.constant 0 : index
    %c0_10 = arith.constant 0 : index
    %20 = vector.load %arg4[%c0_9, %c0_10] : memref<8x128xf32, #tpu.memory_space<vmem>>, vector<8x128xf32>
    tpu.vector_store %arg4[%c0_9, %c0_10], %19 {strides = array<i32>} : memref<8x128xf32, #tpu.memory_space<vmem>>, vector<8x128xf32>,
    %c128_i32 = arith.constant 128 : i32
    %21 = arith.muli %arg0, %c128_i32 : i32
    %22 = tpu.iota {dimensions = array<i32: 1>} : vector<1x128xi32>
    %23 = vector.broadcast %21 : i32 to vector<1x128xi32>
    %24 = arith.addi %23, %22 : vector<1x128xi32>
    %c512_i32 = arith.constant 512 : i32
    %25 = vector.broadcast %c512_i32 : i32 to vector<1x128xi32>
    %26 = arith.cmpi slt, %24, %25 : vector<1x128xi32>
    %27 = arith.extui %26 : vector<1x128xi1> to vector<1x128xi32>
    %28 = arith.sitofp %27 : vector<1x128xi32> to vector<1x128xf32>
    %29 = vector.broadcast %28 : vector<1x128xf32> to vector<8x128xf32>
    %30 = arith.mulf %19, %29 : vector<8x128xf32>
    %cst_11 = arith.constant dense<0.000000e+00> : vector<8xf32>
    %31 = vector.multi_reduction <add>, %30, %cst_11 [1] : vector<8x128xf32> to vector<8xf32>
    %32 = vector.shape_cast %31 : vector<8xf32> to vector<8x1xf32>
    %33 = arith.mulf %30, %30 : vector<8x128xf32>
    %cst_12 = arith.constant dense<0.000000e+00> : vector<8xf32>
    %34 = vector.multi_reduction <add>, %33, %cst_12 [1] : vector<8x128xf32> to vector<8xf32>
    %35 = vector.shape_cast %34 : vector<8xf32> to vector<8x1xf32>
    %36 = tpu.concatenate %32, %35 in 1 : vector<8x1xf32>, vector<8x1xf32> -> vector<8x2xf32>
    %37 = vector.shape_cast %36 : vector<8x2xf32> to vector<1x8x2xf32>
    %c0_13 = arith.constant 0 : index
    %c0_14 = arith.constant 0 : index
    %c0_15 = arith.constant 0 : index
    %38 = vector.load %arg5[%c0_13, %c0_14, %c0_15] : memref<1x8x2xf32, #tpu.memory_space<vmem>>, vector<1x8x2xf32>
    tpu.vector_store %arg5[%c0_13, %c0_14, %c0_15], %37 {strides = array<i32>} : memref<1x8x2xf32, #tpu.memory_space<vmem>>, vector<1x8x2xf32>,
    return
  }
  func.func @transform_0(%arg0: i32) -> (i32, i32) {
    %c0_i32 = arith.constant 0 : i32
    %c0_i32_0 = arith.constant 0 : i32
    return %c0_i32, %arg0 : i32, i32
  }
  func.func @transform_1(%arg0: i32) -> (i32, i32) {
    %c0_i32 = arith.constant 0 : i32
    %c0_i32_0 = arith.constant 0 : i32
    %c0_i32_1 = arith.constant 0 : i32
    return %c0_i32, %c0_i32_0 : i32, i32
  }
  func.func @transform_2(%arg0: i32) -> (i32, i32) {
    %c0_i32 = arith.constant 0 : i32
    %c0_i32_0 = arith.constant 0 : i32
    %c0_i32_1 = arith.constant 0 : i32
    return %c0_i32, %c0_i32_0 : i32, i32
  }
  func.func @transform_3(%arg0: i32) -> (i32, i32) {
    %c0_i32 = arith.constant 0 : i32
    %c0_i32_0 = arith.constant 0 : i32
    return %c0_i32, %arg0 : i32, i32
  }
  func.func @transform_4(%arg0: i32) -> (i32, i32, i32) {
    %c0_i32 = arith.constant 0 : i32
    %c0_i32_0 = arith.constant 0 : i32
    %c0_i32_1 = arith.constant 0 : i32
    return %arg0, %c0_i32, %c0_i32_0 : i32, i32, i32
  }
}

</mosaic_0001>

<llo_original>
// kernel: tpu_custom_call.1
$region0: #{tpu_custom_call.1}
  #allocation0 [shape = 'u32[]', space=smem, size = 0x4, offset = 0x4, fixed_abs, tag = 'smem constant byte address 0x4 - core index']
  #allocation1 [shape = 'u32[144,128]{1,0:T(1,128)}', space=vmem, size = 0x12000, scoped, tag = 'internal scratch']
  %s0 = inlined_call_operand.hbm [shape: bf16[36,512], index: 0, kind: input, shape index: {}]
  %s1 = inlined_call_operand.vmem [shape: bf16[16,36], index: 1, kind: input, shape index: {}]
  %s2 = inlined_call_operand.vmem [shape: f32[16,1], index: 2, kind: input, shape index: {}]
  %s3 = inlined_call_operand.hbm [shape: f32[8,512], index: 3, kind: output, shape index: {0}]
  %s4 = inlined_call_operand.vmem [shape: f32[4,8,2], index: 4, kind: output, shape index: {1}]
  %5 = xla_tuple %s3, %s4
  %s6 = sld [smem:[#allocation0]]
  $region57: #{tpu_custom_call.1} parent=0
    _
  %s8 = ssub.s32 1, %s6
  %s9 = scalar_select 0, %s8, %s6
  $region1: #{tpu_custom_call.1} parent=0
    #allocation2 [shape = 'u8[20480]{0}', space=vmem, size = 0x5000, scoped, tag = 'input window, operand 0']
    #allocation3 [shape = 's32[2]{0}', space=sflag, size = 0x8, scoped, tag = 'scoped memory for tpu_custom_call.1']
    #allocation4 [shape = 's32[2]{0}', space=sflag, size = 0x8, scoped, tag = 'scoped memory for tpu_custom_call.1']
    #allocation5 [shape = 'u8[8192]{0}', space=vmem, size = 0x2000, scoped, tag = 'output window, operand 0']
    %10 = vsyncpa [#allocation3], 0
    %s11 = scalar_lea.sflag [#allocation3], 1
    %12 = vsyncpa %s11, 0
    %13 = vsyncpa [#allocation4], 0
    %s14 = scalar_lea.sflag [#allocation4], 1
    %15 = vsyncpa %s14, 0
    loop: start=0, step=1, limit=6
    $region2: #{tpu_custom_call.1} parent=1 // loop_pre_header
      _
    $region3: #{tpu_custom_call.1} parent=1 // loop_header
      %s17 = sphi 0, %s21
      %p18 = scmp.ge.s32.totalorder %s17, 6
      %s27 = sphi 0, %s29
      %s30 = sphi 0, %s27
      %s31 = sphi 0, %s30
      %s47 = sphi 0, %s31
      %s51 = sphi 0, %s51
      %s53 = sphi 0, %s51
      %s54 = sphi 0, %s53
      %s68 = sphi 0, %s54
      %s72 = sphi 0, %s72
      %s74 = sphi 0, %s72
      %s75 = sphi 0, %s74
      %s89 = sphi 0, %s75
      %s95 = sphi 0, %s97
      %s98 = sphi 0, %s95
      %s99 = sphi 0, %s98
      %s115 = sphi 0, %s99
      %s121 = sphi 0, %s123
      %s124 = sphi 0, %s121
      %s125 = sphi 0, %s124
      %s141 = sphi 0, %s125
    $region4: #{tpu_custom_call.1} parent=1 // loop_header_branch
      %20 = sbr.rel (%p18) target = $region8
    $region5: #{tpu_custom_call.1} parent=1 // loop_body
      %s22 = ssub.s32 %s17, 1
      %s23 = ssub.s32 %s17, 2
      %s24 = sadd.s32 %s17, 1
      %s25 = ssub.s32 %s17, %s24
      %p26 = scmp.eq.s32.totalorder %s25, 0
      %s28 = sadd.s32 %s27, 1
      %s29 = scalar_select %p26, %s27, %s28
      %p32 = pneg %p26
      %p33 = scmp.eq.s32.totalorder %s17, 3
      %p34 = por %p32, %p33
      %p35 = scmp.ne.s32.totalorder %s27, %s30
      %p36 = scmp.eq.s32.totalorder %s17, 0
      %p37 = por %p35, %p36
      %p38 = scmp.ne.s32.totalorder %s27, %s30
      %p39 = scmp.eq.s32.totalorder %s22, 3
      %p40 = por %p38, %p39
      %p41 = scmp.ne.s32.totalorder %s30, %s31
      %p42 = scmp.eq.s32.totalorder %s22, 0
      %p43 = por %p41, %p42
      %p44 = scmp.ne.s32.totalorder %s30, %s31
      %p45 = scmp.eq.s32.totalorder %s23, 3
      %p46 = por %p44, %p45
      %p48 = scmp.ne.s32.totalorder %s31, %s47
      %p49 = scmp.eq.s32.totalorder %s23, 0
      %p50 = por %p48, %p49
      %s52 = sadd.s32 %s51, 1
      %p55 = scmp.eq.s32.totalorder %s17, 3
      %p56 = scmp.ne.s32.totalorder %s51, %s53
      %p57 = scmp.eq.s32.totalorder %s17, 0
      %p58 = por %p56, %p57
      %p59 = scmp.ne.s32.totalorder %s51, %s53
      %p60 = scmp.eq.s32.totalorder %s22, 3
      %p61 = por %p59, %p60
      %p62 = scmp.ne.s32.totalorder %s53, %s54
      %p63 = scmp.eq.s32.totalorder %s22, 0
      %p64 = por %p62, %p63
      %p65 = scmp.ne.s32.totalorder %s53, %s54
      %p66 = scmp.eq.s32.totalorder %s23, 3
      %p67 = por %p65, %p66
      %p69 = scmp.ne.s32.totalorder %s54, %s68
      %p70 = scmp.eq.s32.totalorder %s23, 0
      %p71 = por %p69, %p70
      %s73 = sadd.s32 %s72, 1
      %p76 = scmp.eq.s32.totalorder %s17, 3
      %p77 = scmp.ne.s32.totalorder %s72, %s74
      %p78 = scmp.eq.s32.totalorder %s17, 0
      %p79 = por %p77, %p78
      %p80 = scmp.ne.s32.totalorder %s72, %s74
      %p81 = scmp.eq.s32.totalorder %s22, 3
      %p82 = por %p80, %p81
      %p83 = scmp.ne.s32.totalorder %s74, %s75
      %p84 = scmp.eq.s32.totalorder %s22, 0
      %p85 = por %p83, %p84
      %p86 = scmp.ne.s32.totalorder %s74, %s75
      %p87 = scmp.eq.s32.totalorder %s23, 3
      %p88 = por %p86, %p87
      %p90 = scmp.ne.s32.totalorder %s75, %s89
      %p91 = scmp.eq.s32.totalorder %s23, 0
      %p92 = por %p90, %p91
      %s93 = ssub.s32 %s17, %s24
      %p94 = scmp.eq.s32.totalorder %s93, 0
      %s96 = sadd.s32 %s95, 1
      %s97 = scalar_select %p94, %s95, %s96
      %p100 = pneg %p94
      %p101 = scmp.eq.s32.totalorder %s17, 3
      %p102 = por %p100, %p101
      %p103 = scmp.ne.s32.totalorder %s95, %s98
      %p104 = scmp.eq.s32.totalorder %s17, 0
      %p105 = por %p103, %p104
      %p106 = scmp.ne.s32.totalorder %s95, %s98
      %p107 = scmp.eq.s32.totalorder %s22, 3
      %p108 = por %p106, %p107
      %p109 = scmp.ne.s32.totalorder %s98, %s99
      %p110 = scmp.eq.s32.totalorder %s22, 0
      %p111 = por %p109, %p110
      %p112 = scmp.ne.s32.totalorder %s98, %s99
      %p113 = scmp.eq.s32.totalorder %s23, 3
      %p114 = por %p112, %p113
      %p116 = scmp.ne.s32.totalorder %s99, %s115
      %p117 = scmp.eq.s32.totalorder %s23, 0
      %p118 = por %p116, %p117
      %s119 = ssub.s32 %s17, %s24
      %p120 = scmp.eq.s32.totalorder %s119, 0
      %s122 = sadd.s32 %s121, 1
      %s123 = scalar_select %p120, %s121, %s122
      %p126 = pneg %p120
      %p127 = scmp.eq.s32.totalorder %s17, 3
      %p128 = por %p126, %p127
      %p129 = scmp.ne.s32.totalorder %s121, %s124
      %p130 = scmp.eq.s32.totalorder %s17, 0
      %p131 = por %p129, %p130
      %p132 = scmp.ne.s32.totalorder %s121, %s124
      %p133 = scmp.eq.s32.totalorder %s22, 3
      %p134 = por %p132, %p133
      %p135 = scmp.ne.s32.totalorder %s124, %s125
      %p136 = scmp.eq.s32.totalorder %s22, 0
      %p137 = por %p135, %p136
      %p138 = scmp.ne.s32.totalorder %s124, %s125
      %p139 = scmp.eq.s32.totalorder %s23, 3
      %p140 = por %p138, %p139
      %p142 = scmp.ne.s32.totalorder %s125, %s141
      %p143 = scmp.eq.s32.totalorder %s23, 0
      %p144 = por %p142, %p143
      %p145 = scmp.le.s32.totalorder 1, %s17
      %p146 = scmp.lt.s32.totalorder %s17, 5
      %p147 = pnand %p145, %p146
      %p148 = pneg %p147
      // Predicated region
      $region9: #{tpu_custom_call.1} parent=5 // pred_check
        _
      $region10: #{tpu_custom_call.1} parent=5 // pred_check_branch
        %150 = sbr.rel (%p147) target = $region12
      $region11: #{tpu_custom_call.1} parent=5 // pred_region
        %s151 = ssub.s32 %s17, 1
        // Predicated region
        $region13: #{tpu_custom_call.1} parent=11 // pred_check
          %p152 = pneg %p64
        $region14: #{tpu_custom_call.1} parent=11 // pred_check_branch
          %154 = sbr.rel (%p152) target = $region16
        $region15: #{tpu_custom_call.1} parent=11 // pred_region
          _
        $region16: #{tpu_custom_call.1} parent=11 // pred_fallthru
          _
        // Predicated region
        $region17: #{tpu_custom_call.1} parent=11 // pred_check
          %p155 = pneg %p85
        $region18: #{tpu_custom_call.1} parent=11 // pred_check_branch
          %157 = sbr.rel (%p155) target = $region20
        $region19: #{tpu_custom_call.1} parent=11 // pred_region
          _
        $region20: #{tpu_custom_call.1} parent=11 // pred_fallthru
          _
      $region12: #{tpu_custom_call.1} parent=5 // pred_fallthru
        _
      %p158 = scmp.lt.s32.totalorder %s17, 4
      // Predicated region
      $region21: #{tpu_custom_call.1} parent=5 // pred_check
        %p159 = pneg %p158
      $region22: #{tpu_custom_call.1} parent=5 // pred_check_branch
        %161 = sbr.rel (%p159) target = $region24
      $region23: #{tpu_custom_call.1} parent=5 // pred_region
        // Predicated region
        $region25: #{tpu_custom_call.1} parent=23 // pred_check
          %p162 = pneg %p37
        $region26: #{tpu_custom_call.1} parent=23 // pred_check_branch
          %164 = sbr.rel (%p162) target = $region28
        $region27: #{tpu_custom_call.1} parent=23 // pred_region
          %s165 = sand.u32 %s27, 1
          %s166 = scalar_lea.sflag [#allocation3], %s165
          %s167 = sand.u32 %s27, 1
          %s168 = smul.addr %s167, 20
          %s169 = scalar_lea.vmem [#allocation2], %s168
          %s171 = ssub.s32 320, 320
          %172 = vsyncadd %s166, %s171
          %s173 = smul.addr %s17, 64
          %s174 = scalar_lea.hbm %s0, %s173
          %s175 = sshll.u32 %s169, 4
          %s176 = int_to_ptr.vmem [resolvable:$true] %s175
          %181 = dma.hbm_to_vmem [thread:$0]  %s174, 320, %s176, %s166, 256, 64, 4
        $region28: #{tpu_custom_call.1} parent=23 // pred_fallthru
          _
      $region24: #{tpu_custom_call.1} parent=5 // pred_fallthru
        _
      %p182 = scmp.le.s32.totalorder 1, %s17
      %p183 = scmp.lt.s32.totalorder %s17, 5
      %p184 = pnand %p182, %p183
      %p185 = pneg %p184
      // Predicated region
      $region29: #{tpu_custom_call.1} parent=5 // pred_check
        _
      $region30: #{tpu_custom_call.1} parent=5 // pred_check_branch
        %187 = sbr.rel (%p184) target = $region32
      $region31: #{tpu_custom_call.1} parent=5 // pred_region
        %s188 = ssub.s32 %s17, 1
        %s189 = sand.u32 %s30, 1
        %s190 = scalar_lea.sflag [#allocation3], %s189
        %s191 = sand.u32 %s30, 1
        %s192 = smul.addr %s191, 20
        %s193 = scalar_lea.vmem [#allocation2], %s192
        // Predicated region
        $region33: #{tpu_custom_call.1} parent=31 // pred_check
          %p194 = pneg %p43
        $region34: #{tpu_custom_call.1} parent=31 // pred_check_branch
          %196 = sbr.rel (%p194) target = $region36
        $region35: #{tpu_custom_call.1} parent=31 // pred_region
          %197 = dma.done %s190, 320
        $region36: #{tpu_custom_call.1} parent=31 // pred_fallthru
          _
        %s198 = sand.u32 %s30, 1
        %s199 = scalar_lea.sflag [#allocation3], %s198
        %s200 = sand.u32 %s30, 1
        %s201 = smul.addr %s200, 20
        %s202 = scalar_lea.vmem [#allocation2], %s201
        %p203 = pneg %p43
        %p204 = pneg %p40
        %p205 = pneg %p64
        %p206 = pneg %p61
        %p207 = pneg %p85
        %p208 = pneg %p82
        %p209 = pneg %p111
        %p210 = pneg %p108
        %s211 = sand.u32 %s98, 1
        %s212 = scalar_lea.sflag [#allocation4], %s211
        %s213 = sand.u32 %s98, 1
        %s214 = smul.addr %s213, 8
        %s215 = scalar_lea.vmem [#allocation5], %s214
        %p216 = pneg %p137
        %p217 = pneg %p134
        %p218 = scmp.lt.s32.totalorder %s22, 3
        %s219 = scalar_select %p218, %s22, 3
        %s220 = smul.addr %s219, 8
        %s221 = scalar_lea.vmem %s4, %s220
        %p222 = scmp.lt.s32.totalorder %s22, 3
        %s223 = scalar_select %p222, %s22, 3
        %s224 = smul.addr %s223, 8
        %s225 = scalar_lea.vmem %s4, %s224
        %v227 = vld [vmem:[%s1] sm:$0xf]
        %v228 = vld [vmem:[%s1 + $0x4] sm:$0xf]
        %v229 = vld [vmem:[%s193] sm:$0xf]
        %v230 = vld [vmem:[%s193 + $0x4] sm:$0xf]
        %v231 = vld [vmem:[%s193 + $0x8] sm:$0xf]
        %v232 = vld [vmem:[%s193 + $0xc] sm:$0xf]
        %v233 = vld [vmem:[%s193 + $0x10] sm:$0x3]
        %v234 = vld [vmem:[%s2] sm:$0xff]
        %v235 = vld [vmem:[%s2 + $0x8] sm:$0xff]
        %237 = vset.pattern.permute.xlu0 0
        %238 = vperm.xlu0 %237, %v234
        %v239 = vpop.permute.xlu0 %238
        %242 = vset.pattern.permute.xlu0 0
        %243 = vperm.xlu0 %242, %v235
        %v244 = vpop.permute.xlu0 %243
        %v248 = vunpack.c.l.b16 %v227
        %v249 = vunpack.c.l.b16 %v228
        %v250 = vpack.c.b16 %v249, %v248
        %v256 = vunpack.c.l.b16 %v229
        %v257 = vunpack.c.l.b16 %v230
        %v258 = vunpack.c.l.b16 %v231
        %v259 = vunpack.c.l.b16 %v232
        %v260 = vunpack.c.l.b16 %v233
        %v261 = vpack.c.b16 %v257, %v256
        %v262 = vpack.c.b16 %v259, %v258
        %v263 = vpack.c.b16 %v260, %v260
        %vm266 = vcmask 293888
        %v268 = vsel %vm266, %v250, 0
        %vm270 = vcmask 1041408
        %v272 = vsel %vm270, %v263, 0
        %274 = vmatprep.subr.bf16.mxu0 0
        %275 = vmatpush1.bf16.msra.mxu0 %v261
        %276 = vmatprep.subr.bf16.mxu0 0
        %277 = vmatpush1.bf16.msra.mxu0 %v262
        %278 = vmatprep.subr.bf16.mxu0 0
        %279 = vmatpush1.bf16.msra.mxu0 %v272
        %280 = vmatprep.subr.bf16.mxu0 0
        %281 = vmatpush1.bf16.msra.mxu0 0
        %282 = vmatprep.subr.bf16.mxu0 0
        %283 = vmatpush1.bf16.msra.mxu0 0
        %284 = vmatprep.subr.bf16.mxu0 0
        %285 = vmatpush1.bf16.msra.mxu0 0
        %286 = vmatprep.subr.bf16.mxu0 0
        %287 = vmatpush1.bf16.msra.mxu0 0
        %288 = vmatprep.subr.bf16.mxu0 0
        %289 = vmatpush1.bf16.msra.mxu0 0
        %290 = vmatprep.subr.bf16.mxu0 0
        %291 = vmatpush1.bf16.msra.mxu0 0
        %292 = vmatprep.subr.bf16.mxu0 0
        %293 = vmatpush1.bf16.msra.mxu0 0
        %294 = vmatprep.subr.bf16.mxu0 0
        %295 = vmatpush1.bf16.msra.mxu0 0
        %296 = vmatprep.subr.bf16.mxu0 0
        %297 = vmatpush1.bf16.msra.mxu0 0
        %298 = vmatprep.subr.bf16.mxu0 0
        %299 = vmatpush1.bf16.msra.mxu0 0
        %300 = vmatprep.subr.bf16.mxu0 0
        %301 = vmatpush1.bf16.msra.mxu0 0
        %302 = vmatprep.subr.bf16.mxu0 0
        %303 = vmatpush1.bf16.msra.mxu0 0
        %304 = vmatprep.subr.bf16.mxu0 0
        %305 = vmatpush1.bf16.msra.mxu0 0
        %306 = vmatprep.mubr.bf16.mxu0 0
        %307 = vmatmul.mubr.bf16.gmra.mrb[0].mxu0 %v268
        %v308 = vpop.f32.mrb[0].mxu0
        %v309 = vadd.f32 %v239, %v308
        %v310 = vpop.f32.mrb[0].mxu0
        %v311 = vpop.f32.mrb[0].mxu0
        %v312 = vadd.f32 %v244, %v311
        %v313 = vpop.f32.mrb[0].mxu0
        %314 = vdwg.mxu0
        %vm315 = vcmp.ge.f32.partialorder %v312, 0.0
        %v316 = vmul.f32 %v312, 0.2
        %v317 = vsel %vm315, %v312, %v316
        %v318 = vsub.f32 0.0, %v309
        %v319 = vmul.f32 %v318, 1.442695
        %v320 = vpow.pop %v319
        %v321 = vadd.f32 %v320, 1.0
        %v322 = vrcp.pop %v321
        %v323 = vmul.f32 %v317, %v322
        %324 = vst [vmem:[%s215] sm:$0xff] %v323
        %s325 = smul.u32 %s22, 128
        %v326 = vlaneseq
        %v327 = vand.u32 %v326, 127
        %v328 = vstv %s325
        %v329 = vadd.s32 %v328, %v327
        %vm330 = vcmp.lt.s32.totalorder %v329, 512
        %v331 = vsel %vm330, 1, 0
        %v332 = vcvt.s32.f32 %v331
        %v333 = vmul.f32 %v323, %v332
        %334 = vadd.xlane.f32.xlu0 %v333
        %v335 = vpop.xlane.xlu0 %334
        %v336 = vmul.f32 %v333, %v333
        %337 = vadd.xlane.f32.xlu0 %v336
        %v338 = vpop.xlane.xlu0 %337
        %vm339 = vcmask 7168
        %v340 = vsel %vm339, %v335, %v338
        %vm341 = vcmask 15360
        %342 = vst.msk [vmem:[%s225] sm:$0xff] %vm341, %v340
        %s343 = sand.u32 %s98, 1
        %s344 = scalar_lea.sflag [#allocation4], %s343
        %s345 = sand.u32 %s98, 1
        %s346 = smul.addr %s345, 8
        %s347 = scalar_lea.vmem [#allocation5], %s346
        %p348 = scmp.lt.s32.totalorder %s22, 3
        %s349 = scalar_select %p348, %s22, 3
        %s350 = smul.addr %s349, 8
        %s351 = scalar_lea.vmem %s4, %s350
        // Predicated region
        $region37: #{tpu_custom_call.1} parent=31 // pred_check
          %p352 = pneg %p108
        $region38: #{tpu_custom_call.1} parent=31 // pred_check_branch
          %354 = sbr.rel (%p352) target = $region40
        $region39: #{tpu_custom_call.1} parent=31 // pred_region
          %s356 = ssub.s32 128, 128
          %357 = vsyncadd %s344, %s356
          %s358 = smul.addr %s22, 128
          %s359 = scalar_lea.hbm %s3, %s358
          %s361 = sshll.u32 %s347, 4
          %s362 = int_to_ptr.vmem [resolvable:$true] %s361
          %364 = dma.vmem_to_hbm [thread:$0]  %s362, 128, %s359, %s344
        $region40: #{tpu_custom_call.1} parent=31 // pred_fallthru
          _
        // Predicated region
        $region41: #{tpu_custom_call.1} parent=31 // pred_check
          %p365 = pneg %p134
        $region42: #{tpu_custom_call.1} parent=31 // pred_check_branch
          %367 = sbr.rel (%p365) target = $region44
        $region43: #{tpu_custom_call.1} parent=31 // pred_region
          _
        $region44: #{tpu_custom_call.1} parent=31 // pred_fallthru
          _
      $region32: #{tpu_custom_call.1} parent=5 // pred_fallthru
        _
      %p368 = scmp.le.s32.totalorder 2, %s17
      // Predicated region
      $region45: #{tpu_custom_call.1} parent=5 // pred_check
        %p369 = pneg %p368
      $region46: #{tpu_custom_call.1} parent=5 // pred_check_branch
        %371 = sbr.rel (%p369) target = $region48
      $region47: #{tpu_custom_call.1} parent=5 // pred_region
        %s372 = ssub.s32 %s17, 2
        // Predicated region
        $region49: #{tpu_custom_call.1} parent=47 // pred_check
          %p373 = pneg %p114
        $region50: #{tpu_custom_call.1} parent=47 // pred_check_branch
          %375 = sbr.rel (%p373) target = $region52
        $region51: #{tpu_custom_call.1} parent=47 // pred_region
          %s376 = sand.u32 %s99, 1
          %s377 = scalar_lea.sflag [#allocation4], %s376
          %s378 = sand.u32 %s99, 1
          %s379 = smul.addr %s378, 8
          %s380 = scalar_lea.vmem [#allocation5], %s379
          %381 = dma.done %s377, 128
        $region52: #{tpu_custom_call.1} parent=47 // pred_fallthru
          _
        // Predicated region
        $region53: #{tpu_custom_call.1} parent=47 // pred_check
          %p382 = pneg %p140
        $region54: #{tpu_custom_call.1} parent=47 // pred_check_branch
          %384 = sbr.rel (%p382) target = $region56
        $region55: #{tpu_custom_call.1} parent=47 // pred_region
          %p385 = scmp.lt.s32.totalorder %s23, 3
          %s386 = scalar_select %p385, %s23, 3
          %s387 = smul.addr %s386, 8
          %s388 = scalar_lea.vmem %s4, %s387
        $region56: #{tpu_custom_call.1} parent=47 // pred_fallthru
          _
      $region48: #{tpu_custom_call.1} parent=5 // pred_fallthru
        _
    $region6: #{tpu_custom_call.1} parent=1 // loop_footer
      %s21 = sadd.s32 1, %s17
    $region7: #{tpu_custom_call.1} parent=1 // loop_footer_branch
      %16 = sbr.rel target = $region3
    $region8: #{tpu_custom_call.1} parent=1 // loop_exit
      _
    %389 = vsyncpa [#allocation3], 1
    %s390 = scalar_lea.sflag [#allocation3], 1
    %391 = vsyncpa %s390, 1
    %392 = vsyncpa [#allocation4], 1
    %s393 = scalar_lea.sflag [#allocation4], 1
    %394 = vsyncpa %s393, 1

</llo_original>
